<compile_context>
chip_gen: v6e
topology: v6e:2x2x1
jax: 0.10.0
libtpu: 0.0.40
codegen_flags: <defaults>
</compile_context>

<pallas_src>
import functools

import numpy as np
import jax
import jax.numpy as jnp
from jax import lax
from jax.experimental import pallas as pl
from jax.experimental.pallas import tpu as pltpu


def _tct_loss_kernel(x1_ref, x2_ref, out_ref, c1_ref, c2_ref, *,
                     chunk, cpt, label_num, margin):
    # x1_ref/x2_ref: (TB, D) streamed tiles of the two modalities (native dtype)
    # out_ref:       (1, 1)  scalar loss (written only on the last grid step)
    # c1_ref/c2_ref: (n, D)  f32 center accumulators (VMEM scratch, persist over grid)
    t = pl.program_id(0)
    tb = cpt * chunk
    n = 2 * label_num
    d = x1_ref.shape[1]

    # ---- streamed pooling: TB tile rows -> cpt center rows (hidden under DMA) ----
    # p_tile[l, r] = 1 iff row r of this tile belongs to tile-local center l.
    li = lax.broadcasted_iota(jnp.int32, (cpt, tb), 0)
    rj = lax.broadcasted_iota(jnp.int32, (cpt, tb), 1)
    p_tile = ((rj >= li * chunk) & (rj < (li + 1) * chunk)).astype(x1_ref.dtype)
    inv_chunk = jnp.float32(1.0 / chunk)

    s1 = jnp.dot(p_tile, x1_ref[...], preferred_element_type=jnp.float32) * inv_chunk
    s2 = jnp.dot(p_tile, x2_ref[...], preferred_element_type=jnp.float32) * inv_chunk

    base = t * cpt
    if cpt % 8 == 0:
        base = pl.multiple_of(base, 8)
    c1_ref[pl.ds(base, cpt), :] = s1
    c2_ref[pl.ds(base, cpt), :] = s2

    # ---- epilogue: n x n distances + margin-ranking hinge, once -------------------
    @pl.when(t == pl.num_programs(0) - 1)
    def _():
        c1 = c1_ref[...]                                   # (n, D) f32
        c2 = c2_ref[...]
        ones_row = jnp.ones((1, d), jnp.float32)

        def sq_pdist(c):
            cc = c * c
            sq_col = jnp.sum(cc, axis=1, keepdims=True)    # (n, 1)  ||c_i||^2
            sq_row = lax.dot_general(                      # (1, n)  ||c_j||^2
                ones_row, cc, (((1,), (1,)), ((), ())),
                preferred_element_type=jnp.float32)
            gram = lax.dot_general(                        # (n, n)  <c_i, c_j>
                c, c, (((1,), (1,)), ((), ())),
                preferred_element_type=jnp.float32)
            return jnp.maximum(sq_col + sq_row - 2.0 * gram, 1e-12)

        d1sq = sq_pdist(c1)
        d2sq = sq_pdist(c2)

        # targets = cat([label_uni, label_uni]) with distinct label_uni values, so
        # targets[i] == targets[j]  <=>  |i - j| in {0, label_num}.
        ri = lax.broadcasted_iota(jnp.int32, (n, n), 0)
        ci = lax.broadcasted_iota(jnp.int32, (n, n), 1)
        same = (ri == ci) | (ri == ci + label_num) | (ci == ri + label_num)

        big = jnp.float32(1e30)
        # max/min on squared distances (monotone, all >= 1e-12), sqrt deferred to (n,1).
        ap_sq = jnp.max(jnp.where(same, d1sq, -big), axis=1, keepdims=True)  # (n, 1)
        an_sq = jnp.min(jnp.where(same, big, d2sq), axis=1, keepdims=True)   # (n, 1)

        dist_ap = jnp.sqrt(ap_sq)
        dist_an = jnp.sqrt(an_sq)

        # MarginRankingLoss(dist_an, dist_ap, y=1) = mean(max(0, dist_ap - dist_an + m))
        loss = jnp.mean(jnp.maximum(dist_ap - dist_an + margin, 0.0))
        out_ref[...] = loss.reshape(1, 1)


def _choose_centers_per_tile(n, chunk, B, D, itemsize, max_tile_bytes):
    """Largest centers-per-tile (divisor of n) whose (TB, D) block fits the byte
    target and satisfies the TPU BlockSpec sublane rule (TB % 8 == 0 or TB == B)."""
    target_rows = max(chunk, max_tile_bytes // max(1, D * itemsize))
    valid = [c for c in range(1, n + 1)
             if n % c == 0 and ((c * chunk) % 8 == 0 or c * chunk == B)]
    if not valid:
        return n
    fitting = [c for c in valid if c * chunk <= target_rows]
    return max(fitting) if fitting else min(valid)


def tct_loss(inputs1, inputs2, labels_np, margin=0.7, max_tile_bytes=4 * 1024 * 1024):
    """inputs1/inputs2: (B, D) jnp arrays (f32 or bf16); labels_np: numpy int labels."""
    B, D = inputs1.shape
    assert inputs2.shape == (B, D)
    label_uni = np.unique(np.asarray(labels_np))      # sorted unique (like torch.unique)
    label_num = int(label_uni.shape[0])
    n = 2 * label_num
    assert B % n == 0, "batch must split evenly into 2*label_num chunks"
    chunk = B // n

    itemsize = jnp.dtype(inputs1.dtype).itemsize
    cpt = _choose_centers_per_tile(n, chunk, B, D, itemsize, max_tile_bytes)
    tb = cpt * chunk                                  # rows per grid step
    num_tiles = B // tb

    kernel = functools.partial(_tct_loss_kernel, chunk=chunk, cpt=cpt,
                               label_num=label_num, margin=float(margin))

    # VMEM budget: double-buffered input tiles + center scratch + pooling temp + slack.
    vmem_est = (2 * 2 * tb * D * itemsize + 2 * n * D * 4
                + 2 * cpt * tb * 4 + (1 << 20))
    vmem_limit = int(min(max(32 * 1024 * 1024, 2 * vmem_est), 96 * 1024 * 1024))

    out = pl.pallas_call(
        kernel,
        out_shape=jax.ShapeDtypeStruct((1, 1), jnp.float32),
        grid_spec=pltpu.PrefetchScalarGridSpec(
            num_scalar_prefetch=0,
            grid=(num_tiles,),
            in_specs=[pl.BlockSpec((tb, D), lambda t: (t, 0)),
                      pl.BlockSpec((tb, D), lambda t: (t, 0))],
            out_specs=pl.BlockSpec((1, 1), lambda t: (0, 0)),
            scratch_shapes=[pltpu.VMEM((n, D), jnp.float32),
                            pltpu.VMEM((n, D), jnp.float32)],
        ),
        compiler_params=pltpu.CompilerParams(
            dimension_semantics=("arbitrary",),
            vmem_limit_bytes=vmem_limit,
        ),
    )(inputs1, inputs2)
    return out[0, 0]


def _reference_loss(inputs1, inputs2, labels_np, margin=0.7):
    """Pure-numpy reference mirroring the PyTorch forward."""
    x1 = np.asarray(inputs1, dtype=np.float64)
    x2 = np.asarray(inputs2, dtype=np.float64)
    label_uni = np.unique(labels_np)
    label_num = len(label_uni)
    n = 2 * label_num
    chunk = x1.shape[0] // n
    c1 = x1.reshape(n, chunk, -1).mean(axis=1)
    c2 = x2.reshape(n, chunk, -1).mean(axis=1)

    def pdist(c):
        sq = (c ** 2).sum(axis=1, keepdims=True)
        d = sq + sq.T - 2.0 * c @ c.T
        return np.sqrt(np.clip(d, 1e-12, None))

    d1, d2 = pdist(c1), pdist(c2)
    targets = np.concatenate([label_uni, label_uni])
    same = targets[:, None] == targets[None, :]
    ap = np.array([d1[i][same[i]].max() for i in range(n)])
    an = np.array([d2[i][~same[i]].min() for i in range(n)])
    return np.mean(np.maximum(ap - an + margin, 0.0))


if __name__ == "__main__":
    key = jax.random.PRNGKey(0)
    k1, k2 = jax.random.split(key)

    label_num = 4            # 4 unique classes
    n = 2 * label_num        # 8 centers
    chunk = 2                # 2 samples per chunk
    B = n * chunk            # batch = 16
    D = 32                   # feat_dim

    labels = np.repeat(np.arange(label_num, dtype=np.int32), 2)   # 4 unique labels
    inputs1 = jax.random.normal(k1, (B, D), dtype=jnp.float32)
    inputs2 = jax.random.normal(k2, (B, D), dtype=jnp.float32)

    ref = _reference_loss(np.asarray(inputs1), np.asarray(inputs2), labels, margin=0.7)

    # Default tiling (single grid step at this tiny shape).
    loss = jax.block_until_ready(tct_loss(inputs1, inputs2, labels, margin=0.7))
    np.testing.assert_allclose(np.asarray(loss), ref, rtol=1e-4, atol=1e-5)

    # Force small tiles (8-row blocks -> 2 grid steps) to exercise the streaming
    # accumulator + pl.when epilogue path.
    loss_tiled = jax.block_until_ready(
        tct_loss(inputs1, inputs2, labels, margin=0.7, max_tile_bytes=8 * D * 4))
    np.testing.assert_allclose(np.asarray(loss_tiled), ref, rtol=1e-4, atol=1e-5)

    print("KERNEL_OK")
</pallas_src>

<mosaic_0001>
module attributes {stable_mosaic.version = 11 : i64} {
  func.func @_tct_loss_kernel(%arg0: i32, %arg1: memref<16x32xf32, #tpu.memory_space<vmem>>, %arg2: memref<16x32xf32, #tpu.memory_space<vmem>>, %arg3: memref<1x1xf32, #tpu.memory_space<vmem>>, %arg4: memref<8x32xf32, #tpu.memory_space<vmem>>, %arg5: memref<8x32xf32, #tpu.memory_space<vmem>>) attributes {dimension_semantics = [#tpu.dimension_semantics<arbitrary>], iteration_bounds = array<i64: 1>, scalar_prefetch = 0 : i64, scratch_operands = 2 : i64, tpu.core_type = #tpu.core_type<tc>, window_params = [{transform_indices = @transform_0, window_bounds = array<i64: 16, 32>}, {transform_indices = @transform_1, window_bounds = array<i64: 16, 32>}, {pipeline_mode = #tpu.pipeline_mode<synchronous>, transform_indices = @transform_2, window_bounds = array<i64: 1, 1>}]} {
    %0 = tpu.iota {dimensions = array<i32: 0>} : vector<8x16xi32>
    %1 = tpu.iota {dimensions = array<i32: 1>} : vector<8x16xi32>
    %c2_i32 = arith.constant 2 : i32
    %2 = vector.broadcast %c2_i32 : i32 to vector<8x16xi32>
    %3 = arith.muli %0, %2 : vector<8x16xi32>
    %4 = arith.cmpi sge, %1, %3 : vector<8x16xi32>
    %c1_i32 = arith.constant 1 : i32
    %5 = vector.broadcast %c1_i32 : i32 to vector<8x16xi32>
    %6 = arith.addi %0, %5 : vector<8x16xi32>
    %c2_i32_0 = arith.constant 2 : i32
    %7 = vector.broadcast %c2_i32_0 : i32 to vector<8x16xi32>
    %8 = arith.muli %6, %7 : vector<8x16xi32>
    %9 = arith.cmpi slt, %1, %8 : vector<8x16xi32>
    %10 = arith.andi %4, %9 : vector<8x16xi1>
    %11 = arith.extui %10 : vector<8x16xi1> to vector<8x16xi32>
    %12 = arith.sitofp %11 : vector<8x16xi32> to vector<8x16xf32>
    %c0 = arith.constant 0 : index
    %c0_1 = arith.constant 0 : index
    %13 = vector.load %arg1[%c0, %c0_1] : memref<16x32xf32, #tpu.memory_space<vmem>>, vector<16x32xf32>
    %cst = arith.constant dense<0.000000e+00> : vector<8x32xf32>
    %14 = tpu.matmul %12, %13, %cst {dimension_numbers = #tpu.dot_dimension_numbers<[1], [0], [0], [1], [0, 0, 1, 1], [], []>} : vector<8x16xf32>, vector<16x32xf32>, vector<8x32xf32> -> vector<8x32xf32>
    %cst_2 = arith.constant 5.000000e-01 : f32
    %15 = vector.broadcast %cst_2 : f32 to vector<8x32xf32>
    %16 = arith.mulf %14, %15 : vector<8x32xf32>
    %c0_3 = arith.constant 0 : index
    %c0_4 = arith.constant 0 : index
    %17 = vector.load %arg2[%c0_3, %c0_4] : memref<16x32xf32, #tpu.memory_space<vmem>>, vector<16x32xf32>
    %cst_5 = arith.constant dense<0.000000e+00> : vector<8x32xf32>
    %18 = tpu.matmul %12, %17, %cst_5 {dimension_numbers = #tpu.dot_dimension_numbers<[1], [0], [0], [1], [0, 0, 1, 1], [], []>} : vector<8x16xf32>, vector<16x32xf32>, vector<8x32xf32> -> vector<8x32xf32>
    %cst_6 = arith.constant 5.000000e-01 : f32
    %19 = vector.broadcast %cst_6 : f32 to vector<8x32xf32>
    %20 = arith.mulf %18, %19 : vector<8x32xf32>
    %c8_i32 = arith.constant 8 : i32
    %21 = arith.muli %arg0, %c8_i32 : i32
    %22 = tpu.assume_multiple %21, 8 : i32
    %23 = arith.index_cast %22 : i32 to index
    %c0_7 = arith.constant 0 : index
    %24 = vector.load %arg4[%23, %c0_7] : memref<8x32xf32, #tpu.memory_space<vmem>>, vector<8x32xf32>
    tpu.vector_store %arg4[%23, %c0_7], %16 {strides = array<i32>} : memref<8x32xf32, #tpu.memory_space<vmem>>, vector<8x32xf32>,
    %25 = arith.index_cast %22 : i32 to index
    %c0_8 = arith.constant 0 : index
    %26 = vector.load %arg5[%25, %c0_8] : memref<8x32xf32, #tpu.memory_space<vmem>>, vector<8x32xf32>
    tpu.vector_store %arg5[%25, %c0_8], %20 {strides = array<i32>} : memref<8x32xf32, #tpu.memory_space<vmem>>, vector<8x32xf32>,
    %c0_i32 = arith.constant 0 : i32
    %27 = arith.cmpi eq, %arg0, %c0_i32 : i32
    %28 = arith.extui %27 : i1 to i32
    %c0_i32_9 = arith.constant 0 : i32
    %29 = arith.cmpi ne, %28, %c0_i32_9 : i32
    scf.if %29 {
      %c0_10 = arith.constant 0 : index
      %c0_11 = arith.constant 0 : index
      %30 = vector.load %arg4[%c0_10, %c0_11] : memref<8x32xf32, #tpu.memory_space<vmem>>, vector<8x32xf32>
      %c0_12 = arith.constant 0 : index
      %c0_13 = arith.constant 0 : index
      %31 = vector.load %arg5[%c0_12, %c0_13] : memref<8x32xf32, #tpu.memory_space<vmem>>, vector<8x32xf32>
      %cst_14 = arith.constant 1.000000e+00 : f32
      %32 = vector.broadcast %cst_14 : f32 to vector<1x32xf32>
      %33 = arith.mulf %30, %30 : vector<8x32xf32>
      %cst_15 = arith.constant dense<0.000000e+00> : vector<8xf32>
      %34 = vector.multi_reduction <add>, %33, %cst_15 [1] : vector<8x32xf32> to vector<8xf32>
      %35 = vector.shape_cast %34 : vector<8xf32> to vector<8x1xf32>
      %cst_16 = arith.constant dense<0.000000e+00> : vector<1x8xf32>
      %36 = tpu.matmul %32, %33, %cst_16 {dimension_numbers = #tpu.dot_dimension_numbers<[1], [1], [0], [0], [0, 0, 1, 0], [], []>} : vector<1x32xf32>, vector<8x32xf32>, vector<1x8xf32> -> vector<1x8xf32>
      %cst_17 = arith.constant dense<0.000000e+00> : vector<8x8xf32>
      %37 = tpu.matmul %30, %30, %cst_17 {dimension_numbers = #tpu.dot_dimension_numbers<[1], [1], [0], [0], [0, 0, 1, 0], [], []>} : vector<8x32xf32>, vector<8x32xf32>, vector<8x8xf32> -> vector<8x8xf32>
      %38 = vector.broadcast %35 : vector<8x1xf32> to vector<8x8xf32>
      %39 = vector.broadcast %36 : vector<1x8xf32> to vector<8x8xf32>
      %40 = arith.addf %38, %39 : vector<8x8xf32>
      %cst_18 = arith.constant 2.000000e+00 : f32
      %41 = vector.broadcast %cst_18 : f32 to vector<8x8xf32>
      %42 = arith.mulf %41, %37 : vector<8x8xf32>
      %43 = arith.subf %40, %42 : vector<8x8xf32>
      %cst_19 = arith.constant 9.99999996E-13 : f32
      %44 = vector.broadcast %cst_19 : f32 to vector<8x8xf32>
      %45 = arith.maximumf %43, %44 : vector<8x8xf32>
      %46 = arith.mulf %31, %31 : vector<8x32xf32>
      %cst_20 = arith.constant dense<0.000000e+00> : vector<8xf32>
      %47 = vector.multi_reduction <add>, %46, %cst_20 [1] : vector<8x32xf32> to vector<8xf32>
      %48 = vector.shape_cast %47 : vector<8xf32> to vector<8x1xf32>
      %cst_21 = arith.constant dense<0.000000e+00> : vector<1x8xf32>
      %49 = tpu.matmul %32, %46, %cst_21 {dimension_numbers = #tpu.dot_dimension_numbers<[1], [1], [0], [0], [0, 0, 1, 0], [], []>} : vector<1x32xf32>, vector<8x32xf32>, vector<1x8xf32> -> vector<1x8xf32>
      %cst_22 = arith.constant dense<0.000000e+00> : vector<8x8xf32>
      %50 = tpu.matmul %31, %31, %cst_22 {dimension_numbers = #tpu.dot_dimension_numbers<[1], [1], [0], [0], [0, 0, 1, 0], [], []>} : vector<8x32xf32>, vector<8x32xf32>, vector<8x8xf32> -> vector<8x8xf32>
      %51 = vector.broadcast %48 : vector<8x1xf32> to vector<8x8xf32>
      %52 = vector.broadcast %49 : vector<1x8xf32> to vector<8x8xf32>
      %53 = arith.addf %51, %52 : vector<8x8xf32>
      %cst_23 = arith.constant 2.000000e+00 : f32
      %54 = vector.broadcast %cst_23 : f32 to vector<8x8xf32>
      %55 = arith.mulf %54, %50 : vector<8x8xf32>
      %56 = arith.subf %53, %55 : vector<8x8xf32>
      %cst_24 = arith.constant 9.99999996E-13 : f32
      %57 = vector.broadcast %cst_24 : f32 to vector<8x8xf32>
      %58 = arith.maximumf %56, %57 : vector<8x8xf32>
      %59 = tpu.iota {dimensions = array<i32: 0>} : vector<8x8xi32>
      %60 = tpu.iota {dimensions = array<i32: 1>} : vector<8x8xi32>
      %61 = arith.cmpi eq, %59, %60 : vector<8x8xi32>
      %c4_i32 = arith.constant 4 : i32
      %62 = vector.broadcast %c4_i32 : i32 to vector<8x8xi32>
      %63 = arith.addi %60, %62 : vector<8x8xi32>
      %64 = arith.cmpi eq, %59, %63 : vector<8x8xi32>
      %65 = arith.ori %61, %64 : vector<8x8xi1>
      %c4_i32_25 = arith.constant 4 : i32
      %66 = vector.broadcast %c4_i32_25 : i32 to vector<8x8xi32>
      %67 = arith.addi %59, %66 : vector<8x8xi32>
      %68 = arith.cmpi eq, %60, %67 : vector<8x8xi32>
      %69 = arith.ori %65, %68 : vector<8x8xi1>
      %cst_26 = arith.constant 0.000000e+00 : f32
      %cst_27 = arith.constant 1.000000e+30 : f32
      %70 = arith.subf %cst_26, %cst_27 : f32
      %71 = vector.broadcast %70 : f32 to vector<8x8xf32>
      %72 = arith.select %69, %45, %71 : vector<8x8xi1>, vector<8x8xf32>
      %cst_28 = arith.constant dense<0xFF800000> : vector<8xf32>
      %73 = vector.multi_reduction <maximumf>, %72, %cst_28 [1] : vector<8x8xf32> to vector<8xf32>
      %74 = vector.shape_cast %73 : vector<8xf32> to vector<8x1xf32>
      %cst_29 = arith.constant 1.000000e+30 : f32
      %75 = vector.broadcast %cst_29 : f32 to vector<8x8xf32>
      %76 = arith.select %69, %75, %58 : vector<8x8xi1>, vector<8x8xf32>
      %cst_30 = arith.constant dense<0x7F800000> : vector<8xf32>
      %77 = vector.multi_reduction <minimumf>, %76, %cst_30 [1] : vector<8x8xf32> to vector<8xf32>
      %78 = vector.shape_cast %77 : vector<8xf32> to vector<8x1xf32>
      %79 = math.sqrt %74 : vector<8x1xf32>
      %80 = math.sqrt %78 : vector<8x1xf32>
      %81 = arith.subf %79, %80 : vector<8x1xf32>
      %cst_31 = arith.constant 0.699999988 : f32
      %82 = vector.broadcast %cst_31 : f32 to vector<8x1xf32>
      %83 = arith.addf %81, %82 : vector<8x1xf32>
      %cst_32 = arith.constant 0.000000e+00 : f32
      %84 = vector.broadcast %cst_32 : f32 to vector<8x1xf32>
      %85 = arith.maximumf %83, %84 : vector<8x1xf32>
      %86 = vector.shape_cast %85 : vector<8x1xf32> to vector<1x8x1xf32>
      %cst_33 = arith.constant dense<0.000000e+00> : vector<1xf32>
      %87 = vector.multi_reduction <add>, %86, %cst_33 [1, 2] : vector<1x8x1xf32> to vector<1xf32>
      %88 = vector.shape_cast %87 : vector<1xf32> to vector<1x1x1xf32>
      %89 = vector.extract %88[0, 0, 0] : f32 from vector<1x1x1xf32>
      %cst_34 = arith.constant 8.000000e+00 : f32
      %90 = arith.divf %89, %cst_34 : f32
      %91 = vector.broadcast %90 : f32 to vector<1x1xf32>
      %c0_35 = arith.constant 0 : index
      %c0_36 = arith.constant 0 : index
      %92 = vector.load %arg3[%c0_35, %c0_36] : memref<1x1xf32, #tpu.memory_space<vmem>>, vector<1x1xf32>
      tpu.vector_store %arg3[%c0_35, %c0_36], %91 {strides = array<i32>} : memref<1x1xf32, #tpu.memory_space<vmem>>, vector<1x1xf32>,
    } else {
    }
    return
  }
  func.func @transform_0(%arg0: i32) -> (i32, i32) {
    %c0_i32 = arith.constant 0 : i32
    %c0_i32_0 = arith.constant 0 : i32
    return %arg0, %c0_i32 : i32, i32
  }
  func.func @transform_1(%arg0: i32) -> (i32, i32) {
    %c0_i32 = arith.constant 0 : i32
    %c0_i32_0 = arith.constant 0 : i32
    return %arg0, %c0_i32 : i32, i32
  }
  func.func @transform_2(%arg0: i32) -> (i32, i32) {
    %c0_i32 = arith.constant 0 : i32
    %c0_i32_0 = arith.constant 0 : i32
    %c0_i32_1 = arith.constant 0 : i32
    return %c0_i32, %c0_i32_0 : i32, i32
  }
}

</mosaic_0001>

<llo_original>
// kernel: tpu_custom_call.1
$region0: #{tpu_custom_call.1}
  #allocation0 [shape = 'u32[]', space=smem, size = 0x4, offset = 0x4, fixed_abs, tag = 'smem constant byte address 0x4 - core index']
  #allocation1 [shape = 'u32[144,128]{1,0:T(1,128)}', space=vmem, size = 0x12000, scoped, tag = 'internal scratch']
  #allocation2 [shape = 'f32[8,32]{1,0:T(8,128)}', space=vmem, size = 0x1000, scoped, tag = 'scratch operand']
  #allocation3 [shape = 'f32[8,32]{1,0:T(8,128)}', space=vmem, size = 0x1000, scoped, tag = 'scratch operand']
  %s0 = inlined_call_operand.hbm [shape: f32[16,32], index: 0, kind: input, shape index: {}]
  %s1 = inlined_call_operand.hbm [shape: f32[16,32], index: 1, kind: input, shape index: {}]
  %s2 = inlined_call_operand.hbm [shape: f32[1,1], index: 2, kind: output, shape index: {}]
  %s3 = sld [smem:[#allocation0]]
  $region30: #{tpu_custom_call.1} parent=0
    _
  %s5 = ssub.s32 1, %s3
  %s6 = scalar_select 0, %s5, %s3
  $region1: #{tpu_custom_call.1} parent=0
    #allocation4 [shape = 'u8[8192]{0}', space=vmem, size = 0x2000, scoped, tag = 'input window, operand 0, single buffered']
    #allocation5 [shape = 's32[1]{0}', space=sflag, size = 0x4, scoped, tag = 'scoped memory for tpu_custom_call.1']
    #allocation6 [shape = 's32[1]{0}', space=sflag, size = 0x4, scoped, tag = 'scoped memory for tpu_custom_call.1']
    #allocation7 [shape = 'u8[8192]{0}', space=vmem, size = 0x2000, scoped, tag = 'input window, operand 1, single buffered']
    #allocation8 [shape = 's32[1]{0}', space=sflag, size = 0x4, scoped, tag = 'scoped memory for tpu_custom_call.1']
    #allocation9 [shape = 'u8[512]{0}', space=vmem, size = 0x400, scoped, tag = 'output window, operand 0, single buffered']
    %7 = vsyncpa [#allocation5], 0
    %8 = vsyncpa [#allocation8], 0
    %9 = vsyncpa [#allocation6], 0
    // Predicated region
    $region2: #{tpu_custom_call.1} parent=1 // pred_check
      _
    $region3: #{tpu_custom_call.1} parent=1 // pred_check_branch
      %11 = sbr.rel (0) target = $region5
    $region4: #{tpu_custom_call.1} parent=1 // pred_region
      %s13 = ssub.s32 256, 256
      %14 = vsyncadd [#allocation5], %s13
      %s15 = sshll.u32 [#allocation4], 4
      %s16 = int_to_ptr.vmem [resolvable:$true] %s15
      %21 = dma.hbm_to_vmem [thread:$0]  %s0, 256, %s16, [#allocation5], 128, 128, 8
    $region5: #{tpu_custom_call.1} parent=1 // pred_fallthru
      _
    // Predicated region
    $region6: #{tpu_custom_call.1} parent=1 // pred_check
      _
    $region7: #{tpu_custom_call.1} parent=1 // pred_check_branch
      %23 = sbr.rel (0) target = $region9
    $region8: #{tpu_custom_call.1} parent=1 // pred_region
      %s25 = ssub.s32 256, 256
      %26 = vsyncadd [#allocation8], %s25
      %s27 = sshll.u32 [#allocation7], 4
      %s28 = int_to_ptr.vmem [resolvable:$true] %s27
      %33 = dma.hbm_to_vmem [thread:$0]  %s1, 256, %s28, [#allocation8], 128, 128, 8
    $region9: #{tpu_custom_call.1} parent=1 // pred_fallthru
      _
    // Predicated region
    $region10: #{tpu_custom_call.1} parent=1 // pred_check
      _
    $region11: #{tpu_custom_call.1} parent=1 // pred_check_branch
      %35 = sbr.rel (0) target = $region13
    $region12: #{tpu_custom_call.1} parent=1 // pred_region
      %36 = dma.done [#allocation5], 256
    $region13: #{tpu_custom_call.1} parent=1 // pred_fallthru
      _
    // Predicated region
    $region14: #{tpu_custom_call.1} parent=1 // pred_check
      _
    $region15: #{tpu_custom_call.1} parent=1 // pred_check_branch
      %38 = sbr.rel (0) target = $region17
    $region16: #{tpu_custom_call.1} parent=1 // pred_region
      %39 = dma.done [#allocation8], 256
    $region17: #{tpu_custom_call.1} parent=1 // pred_fallthru
      _
    %v40 = vlaneseq
    %v41 = vshrl.u32 %v40, 7
    %v42 = vlaneseq
    %v43 = vand.u32 %v42, 127
    %v44 = vmul.u32 %v41, 2
    %vm45 = vcmp.ge.s32.totalorder %v43, %v44
    %v46 = vadd.s32 %v41, 1
    %v47 = vmul.u32 %v46, 2
    %vm48 = vcmp.lt.s32.totalorder %v43, %v47
    %vm49 = vmand %vm45, %vm48
    %v50 = vsel %vm49, 1, 0
    %v51 = vcvt.s32.f32 %v50
    %v52 = vld [vmem:[#allocation4] sm:$0xff]
    %v53 = vld [vmem:[#allocation4 + $0x8] sm:$0xff]
    %vm54 = vcmask 130048
    %v56 = vsel %vm54, %v51, 0
    %58 = vmatprep.subr.mxu0 0.0
    %59 = vmatpush1.msra.mxu0 0.0
    %60 = vmatprep.subr.mxu0 0.0
    %61 = vmatpush1.msra.mxu0 0.0
    %62 = vmatprep.subr.mxu0 0.0
    %63 = vmatpush1.msra.mxu0 0.0
    %64 = vmatprep.subr.mxu0 0.0
    %65 = vmatpush1.msra.mxu0 0.0
    %66 = vmatprep.subr.mxu0 0.0
    %67 = vmatpush1.msra.mxu0 0.0
    %68 = vmatprep.subr.mxu0 0.0
    %69 = vmatpush1.msra.mxu0 0.0
    %70 = vmatprep.subr.mxu0 0.0
    %71 = vmatpush1.msra.mxu0 0.0
    %72 = vmatprep.subr.mxu0 0.0
    %73 = vmatpush1.msra.mxu0 0.0
    %74 = vmatprep.subr.mxu0 0.0
    %75 = vmatpush1.msra.mxu0 0.0
    %76 = vmatprep.subr.mxu0 0.0
    %77 = vmatpush1.msra.mxu0 0.0
    %78 = vmatprep.subr.mxu0 0.0
    %79 = vmatpush1.msra.mxu0 0.0
    %80 = vmatprep.subr.mxu0 0.0
    %81 = vmatpush1.msra.mxu0 0.0
    %82 = vmatprep.subr.mxu0 0.0
    %83 = vmatpush1.msra.mxu0 0.0
    %84 = vmatprep.subr.mxu0 0.0
    %85 = vmatpush1.msra.mxu0 0.0
    %86 = vmatprep.subr.mxu0 0.0
    %87 = vmatpush1.msra.mxu0 %v53
    %88 = vmatprep.subr.mxu0 0.0
    %89 = vmatpush1.msra.mxu0 %v52
    %90 = vmatprep.subr.mxu0 0.0
    %91 = vmatpush2.msra.mxu0 0.0
    %92 = vmatprep.subr.mxu0 0.0
    %93 = vmatpush2.msra.mxu0 0.0
    %94 = vmatprep.subr.mxu0 0.0
    %95 = vmatpush2.msra.mxu0 0.0
    %96 = vmatprep.subr.mxu0 0.0
    %97 = vmatpush2.msra.mxu0 0.0
    %98 = vmatprep.subr.mxu0 0.0
    %99 = vmatpush2.msra.mxu0 0.0
    %100 = vmatprep.subr.mxu0 0.0
    %101 = vmatpush2.msra.mxu0 0.0
    %102 = vmatprep.subr.mxu0 0.0
    %103 = vmatpush2.msra.mxu0 0.0
    %104 = vmatprep.subr.mxu0 0.0
    %105 = vmatpush2.msra.mxu0 0.0
    %106 = vmatprep.subr.mxu0 0.0
    %107 = vmatpush2.msra.mxu0 0.0
    %108 = vmatprep.subr.mxu0 0.0
    %109 = vmatpush2.msra.mxu0 0.0
    %110 = vmatprep.subr.mxu0 0.0
    %111 = vmatpush2.msra.mxu0 0.0
    %112 = vmatprep.subr.mxu0 0.0
    %113 = vmatpush2.msra.mxu0 0.0
    %114 = vmatprep.subr.mxu0 0.0
    %115 = vmatpush2.msra.mxu0 0.0
    %116 = vmatprep.subr.mxu0 0.0
    %117 = vmatpush2.msra.mxu0 0.0
    %118 = vmatprep.subr.mxu0 0.0
    %119 = vmatpush2.msra.mxu0 0.0
    %120 = vmatprep.subr.mxu0 0.0
    %121 = vmatpush2.msra.mxu0 0.0
    %122 = vmatprep.mubr.f32.mxu0 0.0
    %123 = vmatmul.mubr.f32.gmra.mxu0 %v56
    %v124 = vpop.f32.mrf.mxu0
    %v125 = vadd.f32 0.0, %v124
    %v126 = vpop.f32.mrf.mxu0
    %127 = vdwg.mxu0
    %v128 = vmul.f32 %v125, 0.5
    %v129 = vld [vmem:[#allocation7] sm:$0xff]
    %v130 = vld [vmem:[#allocation7 + $0x8] sm:$0xff]
    %131 = vmatprep.subr.mxu0 0.0
    %132 = vmatpush1.msra.mxu0 0.0
    %133 = vmatprep.subr.mxu0 0.0
    %134 = vmatpush1.msra.mxu0 0.0
    %135 = vmatprep.subr.mxu0 0.0
    %136 = vmatpush1.msra.mxu0 0.0
    %137 = vmatprep.subr.mxu0 0.0
    %138 = vmatpush1.msra.mxu0 0.0
    %139 = vmatprep.subr.mxu0 0.0
    %140 = vmatpush1.msra.mxu0 0.0
    %141 = vmatprep.subr.mxu0 0.0
    %142 = vmatpush1.msra.mxu0 0.0
    %143 = vmatprep.subr.mxu0 0.0
    %144 = vmatpush1.msra.mxu0 0.0
    %145 = vmatprep.subr.mxu0 0.0
    %146 = vmatpush1.msra.mxu0 0.0
    %147 = vmatprep.subr.mxu0 0.0
    %148 = vmatpush1.msra.mxu0 0.0
    %149 = vmatprep.subr.mxu0 0.0
    %150 = vmatpush1.msra.mxu0 0.0
    %151 = vmatprep.subr.mxu0 0.0
    %152 = vmatpush1.msra.mxu0 0.0
    %153 = vmatprep.subr.mxu0 0.0
    %154 = vmatpush1.msra.mxu0 0.0
    %155 = vmatprep.subr.mxu0 0.0
    %156 = vmatpush1.msra.mxu0 0.0
    %157 = vmatprep.subr.mxu0 0.0
    %158 = vmatpush1.msra.mxu0 0.0
    %159 = vmatprep.subr.mxu0 0.0
    %160 = vmatpush1.msra.mxu0 %v130
    %161 = vmatprep.subr.mxu0 0.0
    %162 = vmatpush1.msra.mxu0 %v129
    %163 = vmatprep.subr.mxu0 0.0
    %164 = vmatpush2.msra.mxu0 0.0
    %165 = vmatprep.subr.mxu0 0.0
    %166 = vmatpush2.msra.mxu0 0.0
    %167 = vmatprep.subr.mxu0 0.0
    %168 = vmatpush2.msra.mxu0 0.0
    %169 = vmatprep.subr.mxu0 0.0
    %170 = vmatpush2.msra.mxu0 0.0
    %171 = vmatprep.subr.mxu0 0.0
    %172 = vmatpush2.msra.mxu0 0.0
    %173 = vmatprep.subr.mxu0 0.0
    %174 = vmatpush2.msra.mxu0 0.0
    %175 = vmatprep.subr.mxu0 0.0
    %176 = vmatpush2.msra.mxu0 0.0
    %177 = vmatprep.subr.mxu0 0.0
    %178 = vmatpush2.msra.mxu0 0.0
    %179 = vmatprep.subr.mxu0 0.0
    %180 = vmatpush2.msra.mxu0 0.0
    %181 = vmatprep.subr.mxu0 0.0
    %182 = vmatpush2.msra.mxu0 0.0
    %183 = vmatprep.subr.mxu0 0.0
    %184 = vmatpush2.msra.mxu0 0.0
    %185 = vmatprep.subr.mxu0 0.0
    %186 = vmatpush2.msra.mxu0 0.0
    %187 = vmatprep.subr.mxu0 0.0
    %188 = vmatpush2.msra.mxu0 0.0
    %189 = vmatprep.subr.mxu0 0.0
    %190 = vmatpush2.msra.mxu0 0.0
    %191 = vmatprep.subr.mxu0 0.0
    %192 = vmatpush2.msra.mxu0 0.0
    %193 = vmatprep.subr.mxu0 0.0
    %194 = vmatpush2.msra.mxu0 0.0
    %195 = vmatprep.mubr.f32.mxu0 0.0
    %196 = vmatmul.mubr.f32.gmra.mxu0 %v56
    %v197 = vpop.f32.mrf.mxu0
    %v198 = vadd.f32 0.0, %v197
    %v199 = vpop.f32.mrf.mxu0
    %200 = vdwg.mxu0
    %v201 = vmul.f32 %v198, 0.5
    %s202 = smul.u32 0, 8
    %s203 = scalar_lea.vmem [#allocation2], %s202
    %vm204 = vcmask 261120
    %205 = vst.msk [vmem:[%s203] sm:$0xff] %vm204, %v128
    %s206 = scalar_lea.vmem [#allocation3], %s202
    %207 = vst.msk [vmem:[%s206] sm:$0xff] %vm204, %v201
    %p208 = scmp.eq.s32.totalorder 0, 0
    // Predicated region
    $region18: #{tpu_custom_call.1} parent=1 // pred_check
      %p209 = pneg %p208
    $region19: #{tpu_custom_call.1} parent=1 // pred_check_branch
      %211 = sbr.rel (%p209) target = $region21
    $region20: #{tpu_custom_call.1} parent=1 // pred_region
      %v212 = vld [vmem:[#allocation2] sm:$0xff]
      %v213 = vld [vmem:[#allocation3] sm:$0xff]
      %v214 = vmul.f32 %v212, %v212
      %v215 = vsel %vm204, %v214, 0.0
      %216 = vadd.xlane.f32.xlu0 %v215
      %v217 = vpop.xlane.xlu0 %216
      %v219 = vsel %vm204, 1.0, 0
      %v222 = vsel %vm204, %v214, 0
      %224 = vmatprep.subr.mxu0 0.0
      %225 = vmatpush1.xpose.msra.mxu0 0.0
      %226 = vmatprep.subr.mxu0 0.0
      %227 = vmatpush1.xpose.msra.mxu0 0.0
      %228 = vmatprep.subr.mxu0 0.0
      %229 = vmatpush1.xpose.msra.mxu0 0.0
      %230 = vmatprep.subr.mxu0 0.0
      %231 = vmatpush1.xpose.msra.mxu0 0.0
      %232 = vmatprep.subr.mxu0 0.0
      %233 = vmatpush1.xpose.msra.mxu0 0.0
      %234 = vmatprep.subr.mxu0 0.0
      %235 = vmatpush1.xpose.msra.mxu0 0.0
      %236 = vmatprep.subr.mxu0 0.0
      %237 = vmatpush1.xpose.msra.mxu0 0.0
      %238 = vmatprep.subr.mxu0 0.0
      %239 = vmatpush1.xpose.msra.mxu0 0.0
      %240 = vmatprep.subr.mxu0 0.0
      %241 = vmatpush1.xpose.msra.mxu0 0.0
      %242 = vmatprep.subr.mxu0 0.0
      %243 = vmatpush1.xpose.msra.mxu0 0.0
      %244 = vmatprep.subr.mxu0 0.0
      %245 = vmatpush1.xpose.msra.mxu0 0.0
      %246 = vmatprep.subr.mxu0 0.0
      %247 = vmatpush1.xpose.msra.mxu0 0.0
      %248 = vmatprep.subr.mxu0 0.0
      %249 = vmatpush1.xpose.msra.mxu0 0.0
      %250 = vmatprep.subr.mxu0 0.0
      %251 = vmatpush1.xpose.msra.mxu0 0.0
      %252 = vmatprep.subr.mxu0 0.0
      %253 = vmatpush1.xpose.msra.mxu0 0.0
      %254 = vmatprep.subr.mxu0 0.0
      %255 = vmatpush1.xpose.msra.mxu0 %v222
      %256 = vmatprep.subr.mxu0 0.0
      %257 = vmatpush2.xpose.msra.mxu0 0.0
      %258 = vmatprep.subr.mxu0 0.0
      %259 = vmatpush2.xpose.msra.mxu0 0.0
      %260 = vmatprep.subr.mxu0 0.0
      %261 = vmatpush2.xpose.msra.mxu0 0.0
      %262 = vmatprep.subr.mxu0 0.0
      %263 = vmatpush2.xpose.msra.mxu0 0.0
      %264 = vmatprep.subr.mxu0 0.0
      %265 = vmatpush2.xpose.msra.mxu0 0.0
      %266 = vmatprep.subr.mxu0 0.0
      %267 = vmatpush2.xpose.msra.mxu0 0.0
      %268 = vmatprep.subr.mxu0 0.0
      %269 = vmatpush2.xpose.msra.mxu0 0.0
      %270 = vmatprep.subr.mxu0 0.0
      %271 = vmatpush2.xpose.msra.mxu0 0.0
      %272 = vmatprep.subr.mxu0 0.0
      %273 = vmatpush2.xpose.msra.mxu0 0.0
      %274 = vmatprep.subr.mxu0 0.0
      %275 = vmatpush2.xpose.msra.mxu0 0.0
      %276 = vmatprep.subr.mxu0 0.0
      %277 = vmatpush2.xpose.msra.mxu0 0.0
      %278 = vmatprep.subr.mxu0 0.0
      %279 = vmatpush2.xpose.msra.mxu0 0.0
      %280 = vmatprep.subr.mxu0 0.0
      %281 = vmatpush2.xpose.msra.mxu0 0.0
      %282 = vmatprep.subr.mxu0 0.0
      %283 = vmatpush2.xpose.msra.mxu0 0.0
      %284 = vmatprep.subr.mxu0 0.0
      %285 = vmatpush2.xpose.msra.mxu0 0.0
      %286 = vmatprep.subr.mxu0 0.0
      %287 = vmatpush2.xpose.msra.mxu0 0.0
      %288 = vmatprep.mubr.f32.mxu0 0.0
      %289 = vmatmul.mubr.f32.gmra.mxu0 %v219
      %v290 = vpop.f32.mrf.mxu0
      %v291 = vadd.f32 0.0, %v290
      %v292 = vpop.f32.mrf.mxu0
      %293 = vdwg.mxu0
      %v295 = vsel %vm204, %v212, 0
      %297 = vmatprep.subr.mxu0 0.0
      %298 = vmatpush1.xpose.msra.mxu0 0.0
      %299 = vmatprep.subr.mxu0 0.0
      %300 = vmatpush1.xpose.msra.mxu0 0.0
      %301 = vmatprep.subr.mxu0 0.0
      %302 = vmatpush1.xpose.msra.mxu0 0.0
      %303 = vmatprep.subr.mxu0 0.0
      %304 = vmatpush1.xpose.msra.mxu0 0.0
      %305 = vmatprep.subr.mxu0 0.0
      %306 = vmatpush1.xpose.msra.mxu0 0.0
      %307 = vmatprep.subr.mxu0 0.0
      %308 = vmatpush1.xpose.msra.mxu0 0.0
      %309 = vmatprep.subr.mxu0 0.0
      %310 = vmatpush1.xpose.msra.mxu0 0.0
      %311 = vmatprep.subr.mxu0 0.0
      %312 = vmatpush1.xpose.msra.mxu0 0.0
      %313 = vmatprep.subr.mxu0 0.0
      %314 = vmatpush1.xpose.msra.mxu0 0.0
      %315 = vmatprep.subr.mxu0 0.0
      %316 = vmatpush1.xpose.msra.mxu0 0.0
      %317 = vmatprep.subr.mxu0 0.0
      %318 = vmatpush1.xpose.msra.mxu0 0.0
      %319 = vmatprep.subr.mxu0 0.0
      %320 = vmatpush1.xpose.msra.mxu0 0.0
      %321 = vmatprep.subr.mxu0 0.0
      %322 = vmatpush1.xpose.msra.mxu0 0.0
      %323 = vmatprep.subr.mxu0 0.0
      %324 = vmatpush1.xpose.msra.mxu0 0.0
      %325 = vmatprep.subr.mxu0 0.0
      %326 = vmatpush1.xpose.msra.mxu0 0.0
      %327 = vmatprep.subr.mxu0 0.0
      %328 = vmatpush1.xpose.msra.mxu0 %v295
      %329 = vmatprep.subr.mxu0 0.0
      %330 = vmatpush2.xpose.msra.mxu0 0.0
      %331 = vmatprep.subr.mxu0 0.0
      %332 = vmatpush2.xpose.msra.mxu0 0.0
      %333 = vmatprep.subr.mxu0 0.0
      %334 = vmatpush2.xpose.msra.mxu0 0.0
      %335 = vmatprep.subr.mxu0 0.0
      %336 = vmatpush2.xpose.msra.mxu0 0.0
      %337 = vmatprep.subr.mxu0 0.0
      %338 = vmatpush2.xpose.msra.mxu0 0.0
      %339 = vmatprep.subr.mxu0 0.0
      %340 = vmatpush2.xpose.msra.mxu0 0.0
      %341 = vmatprep.subr.mxu0 0.0
      %342 = vmatpush2.xpose.msra.mxu0 0.0
      %343 = vmatprep.subr.mxu0 0.0
      %344 = vmatpush2.xpose.msra.mxu0 0.0
      %345 = vmatprep.subr.mxu0 0.0
      %346 = vmatpush2.xpose.msra.mxu0 0.0
      %347 = vmatprep.subr.mxu0 0.0
      %348 = vmatpush2.xpose.msra.mxu0 0.0
      %349 = vmatprep.subr.mxu0 0.0
      %350 = vmatpush2.xpose.msra.mxu0 0.0
      %351 = vmatprep.subr.mxu0 0.0
      %352 = vmatpush2.xpose.msra.mxu0 0.0
      %353 = vmatprep.subr.mxu0 0.0
      %354 = vmatpush2.xpose.msra.mxu0 0.0
      %355 = vmatprep.subr.mxu0 0.0
      %356 = vmatpush2.xpose.msra.mxu0 0.0
      %357 = vmatprep.subr.mxu0 0.0
      %358 = vmatpush2.xpose.msra.mxu0 0.0
      %359 = vmatprep.subr.mxu0 0.0
      %360 = vmatpush2.xpose.msra.mxu0 0.0
      %361 = vmatprep.mubr.f32.mxu0 0.0
      %362 = vmatmul.mubr.f32.gmra.mxu0 %v295
      %v363 = vpop.f32.mrf.mxu0
      %v364 = vadd.f32 0.0, %v363
      %v365 = vpop.f32.mrf.mxu0
      %366 = vdwg.mxu0
      %v367 = vlaneseq
      %v368 = vshrl.u32 %v367, 7
      %v369 = vsub.s32 0, %v368
      %v370 = vrot.slane %v291, %v369
      %v371 = vadd.f32 %v217, %v370
      %v372 = vmul.f32 %v364, 2.0
      %v373 = vsub.f32 %v371, %v372
      %v374 = vmax.f32 %v373, 1e-12
      %v375 = vmul.f32 %v213, %v213
      %v376 = vsel %vm204, %v375, 0.0
      %377 = vadd.xlane.f32.xlu0 %v376
      %v378 = vpop.xlane.xlu0 %377
      %v380 = vsel %vm204, %v375, 0
      %382 = vmatprep.subr.mxu0 0.0
      %383 = vmatpush1.xpose.msra.mxu0 0.0
      %384 = vmatprep.subr.mxu0 0.0
      %385 = vmatpush1.xpose.msra.mxu0 0.0
      %386 = vmatprep.subr.mxu0 0.0
      %387 = vmatpush1.xpose.msra.mxu0 0.0
      %388 = vmatprep.subr.mxu0 0.0
      %389 = vmatpush1.xpose.msra.mxu0 0.0
      %390 = vmatprep.subr.mxu0 0.0
      %391 = vmatpush1.xpose.msra.mxu0 0.0
      %392 = vmatprep.subr.mxu0 0.0
      %393 = vmatpush1.xpose.msra.mxu0 0.0
      %394 = vmatprep.subr.mxu0 0.0
      %395 = vmatpush1.xpose.msra.mxu0 0.0
      %396 = vmatprep.subr.mxu0 0.0
      %397 = vmatpush1.xpose.msra.mxu0 0.0
      %398 = vmatprep.subr.mxu0 0.0
      %399 = vmatpush1.xpose.msra.mxu0 0.0
      %400 = vmatprep.subr.mxu0 0.0
      %401 = vmatpush1.xpose.msra.mxu0 0.0
      %402 = vmatprep.subr.mxu0 0.0
      %403 = vmatpush1.xpose.msra.mxu0 0.0
      %404 = vmatprep.subr.mxu0 0.0
      %405 = vmatpush1.xpose.msra.mxu0 0.0
      %406 = vmatprep.subr.mxu0 0.0
      %407 = vmatpush1.xpose.msra.mxu0 0.0
      %408 = vmatprep.subr.mxu0 0.0
      %409 = vmatpush1.xpose.msra.mxu0 0.0
      %410 = vmatprep.subr.mxu0 0.0
      %411 = vmatpush1.xpose.msra.mxu0 0.0
      %412 = vmatprep.subr.mxu0 0.0
      %413 = vmatpush1.xpose.msra.mxu0 %v380
      %414 = vmatprep.subr.mxu0 0.0
      %415 = vmatpush2.xpose.msra.mxu0 0.0
      %416 = vmatprep.subr.mxu0 0.0
      %417 = vmatpush2.xpose.msra.mxu0 0.0
      %418 = vmatprep.subr.mxu0 0.0
      %419 = vmatpush2.xpose.msra.mxu0 0.0
      %420 = vmatprep.subr.mxu0 0.0
      %421 = vmatpush2.xpose.msra.mxu0 0.0
      %422 = vmatprep.subr.mxu0 0.0
      %423 = vmatpush2.xpose.msra.mxu0 0.0
      %424 = vmatprep.subr.mxu0 0.0
      %425 = vmatpush2.xpose.msra.mxu0 0.0
      %426 = vmatprep.subr.mxu0 0.0
      %427 = vmatpush2.xpose.msra.mxu0 0.0
      %428 = vmatprep.subr.mxu0 0.0
      %429 = vmatpush2.xpose.msra.mxu0 0.0
      %430 = vmatprep.subr.mxu0 0.0
      %431 = vmatpush2.xpose.msra.mxu0 0.0
      %432 = vmatprep.subr.mxu0 0.0
      %433 = vmatpush2.xpose.msra.mxu0 0.0
      %434 = vmatprep.subr.mxu0 0.0
      %435 = vmatpush2.xpose.msra.mxu0 0.0
      %436 = vmatprep.subr.mxu0 0.0
      %437 = vmatpush2.xpose.msra.mxu0 0.0
      %438 = vmatprep.subr.mxu0 0.0
      %439 = vmatpush2.xpose.msra.mxu0 0.0
      %440 = vmatprep.subr.mxu0 0.0
      %441 = vmatpush2.xpose.msra.mxu0 0.0
      %442 = vmatprep.subr.mxu0 0.0
      %443 = vmatpush2.xpose.msra.mxu0 0.0
      %444 = vmatprep.subr.mxu0 0.0
      %445 = vmatpush2.xpose.msra.mxu0 0.0
      %446 = vmatprep.mubr.f32.mxu0 0.0
      %447 = vmatmul.mubr.f32.gmra.mxu0 %v219
      %v448 = vpop.f32.mrf.mxu0
      %v449 = vadd.f32 0.0, %v448
      %v450 = vpop.f32.mrf.mxu0
      %451 = vdwg.mxu0
      %v453 = vsel %vm204, %v213, 0
      %455 = vmatprep.subr.mxu0 0.0
      %456 = vmatpush1.xpose.msra.mxu0 0.0
      %457 = vmatprep.subr.mxu0 0.0
      %458 = vmatpush1.xpose.msra.mxu0 0.0
      %459 = vmatprep.subr.mxu0 0.0
      %460 = vmatpush1.xpose.msra.mxu0 0.0
      %461 = vmatprep.subr.mxu0 0.0
      %462 = vmatpush1.xpose.msra.mxu0 0.0
      %463 = vmatprep.subr.mxu0 0.0
      %464 = vmatpush1.xpose.msra.mxu0 0.0
      %465 = vmatprep.subr.mxu0 0.0
      %466 = vmatpush1.xpose.msra.mxu0 0.0
      %467 = vmatprep.subr.mxu0 0.0
      %468 = vmatpush1.xpose.msra.mxu0 0.0
      %469 = vmatprep.subr.mxu0 0.0
      %470 = vmatpush1.xpose.msra.mxu0 0.0
      %471 = vmatprep.subr.mxu0 0.0
      %472 = vmatpush1.xpose.msra.mxu0 0.0
      %473 = vmatprep.subr.mxu0 0.0
      %474 = vmatpush1.xpose.msra.mxu0 0.0
      %475 = vmatprep.subr.mxu0 0.0
      %476 = vmatpush1.xpose.msra.mxu0 0.0
      %477 = vmatprep.subr.mxu0 0.0
      %478 = vmatpush1.xpose.msra.mxu0 0.0
      %479 = vmatprep.subr.mxu0 0.0
      %480 = vmatpush1.xpose.msra.mxu0 0.0
      %481 = vmatprep.subr.mxu0 0.0
      %482 = vmatpush1.xpose.msra.mxu0 0.0
      %483 = vmatprep.subr.mxu0 0.0
      %484 = vmatpush1.xpose.msra.mxu0 0.0
      %485 = vmatprep.subr.mxu0 0.0
      %486 = vmatpush1.xpose.msra.mxu0 %v453
      %487 = vmatprep.subr.mxu0 0.0
      %488 = vmatpush2.xpose.msra.mxu0 0.0
      %489 = vmatprep.subr.mxu0 0.0
      %490 = vmatpush2.xpose.msra.mxu0 0.0
      %491 = vmatprep.subr.mxu0 0.0
      %492 = vmatpush2.xpose.msra.mxu0 0.0
      %493 = vmatprep.subr.mxu0 0.0
      %494 = vmatpush2.xpose.msra.mxu0 0.0
      %495 = vmatprep.subr.mxu0 0.0
      %496 = vmatpush2.xpose.msra.mxu0 0.0
      %497 = vmatprep.subr.mxu0 0.0
      %498 = vmatpush2.xpose.msra.mxu0 0.0
      %499 = vmatprep.subr.mxu0 0.0
      %500 = vmatpush2.xpose.msra.mxu0 0.0
      %501 = vmatprep.subr.mxu0 0.0
      %502 = vmatpush2.xpose.msra.mxu0 0.0
      %503 = vmatprep.subr.mxu0 0.0
      %504 = vmatpush2.xpose.msra.mxu0 0.0
      %505 = vmatprep.subr.mxu0 0.0
      %506 = vmatpush2.xpose.msra.mxu0 0.0
      %507 = vmatprep.subr.mxu0 0.0
      %508 = vmatpush2.xpose.msra.mxu0 0.0
      %509 = vmatprep.subr.mxu0 0.0
      %510 = vmatpush2.xpose.msra.mxu0 0.0
      %511 = vmatprep.subr.mxu0 0.0
      %512 = vmatpush2.xpose.msra.mxu0 0.0
      %513 = vmatprep.subr.mxu0 0.0
      %514 = vmatpush2.xpose.msra.mxu0 0.0
      %515 = vmatprep.subr.mxu0 0.0
      %516 = vmatpush2.xpose.msra.mxu0 0.0
      %517 = vmatprep.subr.mxu0 0.0
      %518 = vmatpush2.xpose.msra.mxu0 0.0
      %519 = vmatprep.mubr.f32.mxu0 0.0
      %520 = vmatmul.mubr.f32.gmra.mxu0 %v453
      %v521 = vpop.f32.mrf.mxu0
      %v522 = vadd.f32 0.0, %v521
      %v523 = vpop.f32.mrf.mxu0
      %524 = vdwg.mxu0
      %v525 = vlaneseq
      %v526 = vshrl.u32 %v525, 7
      %v527 = vsub.s32 0, %v526
      %v528 = vrot.slane %v449, %v527
      %v529 = vadd.f32 %v378, %v528
      %v530 = vmul.f32 %v522, 2.0
      %v531 = vsub.f32 %v529, %v530
      %v532 = vmax.f32 %v531, 1e-12
      %vm533 = vcmp.eq.s32.totalorder %v41, %v43
      %v534 = vadd.s32 %v43, 4
      %vm535 = vcmp.eq.s32.totalorder %v41, %v534
      %vm536 = vmor %vm533, %vm535
      %v537 = vadd.s32 %v41, 4
      %vm538 = vcmp.eq.s32.totalorder %v43, %v537
      %vm539 = vmor %vm536, %vm538
      %v540 = vsel %vm539, %v374, -1e+30
      %vm541 = vcmask 64512
      %v542 = vsel %vm541, %v540, -inf
      %543 = vmax.xlane.f32.xlu0 %v542
      %v544 = vpop.xlane.xlu0 %543
      %v545 = vsel %vm539, 1e+30, %v532
      %v546 = vsel %vm541, %v545, inf
      %547 = vmin.xlane.f32.xlu0 %v546
      %v548 = vpop.xlane.xlu0 %547
      %v549 = vrsqrt.pop %v544
      %v550 = vmul.f32 %v544, %v549
      %vm551 = vcmp.eq.f32.partialorder %v544, inf
      %v552 = vsel %vm551, %v544, %v550
      %vm553 = vcmp.eq.f32.partialorder %v544, 0.0
      %v554 = vand.u32 %v544, 2147483648
      %v555 = vsel %vm553, %v554, %v552
      %v556 = vrsqrt.pop %v548
      %v557 = vmul.f32 %v548, %v556
      %vm558 = vcmp.eq.f32.partialorder %v548, inf
      %v559 = vsel %vm558, %v548, %v557
      %vm560 = vcmp.eq.f32.partialorder %v548, 0.0
      %v561 = vand.u32 %v548, 2147483648
      %v562 = vsel %vm560, %v561, %v559
      %v563 = vsub.f32 %v555, %v562
      %v564 = vadd.f32 %v563, 0.7
      %v565 = vmax.f32 %v564, 0.0
      %vm566 = vcmask 7168
      %v567 = vsel %vm566, %v565, 0.0
      %568 = vadd.xlane.f32.xlu0 %v567
      %v569 = vpop.xlane.xlu0 %568
      %v570 = vrot.slane %v569, 4
      %v571 = vadd.f32 %v569, %v570
      %v572 = vrot.slane %v571, 2
      %v573 = vadd.f32 %v571, %v572
      %v574 = vrot.slane %v573, 1
      %v575 = vadd.f32 %v573, %v574
      %s576 = vtos %v575
      %v577 = vrcp.pop 8.0
      %s578 = vtos %v577
      %s579 = smul.f32 %s576, %s578
      %v580 = vstv %s579
      %vm581 = vcmask 0
      %582 = vst.msk [vmem:[#allocation9] sm:$0x1] %vm581, %v580
    $region21: #{tpu_custom_call.1} parent=1 // pred_fallthru
      _
    // Predicated region
    $region22: #{tpu_custom_call.1} parent=1 // pred_check
      _
    $region23: #{tpu_custom_call.1} parent=1 // pred_check_branch
      %584 = sbr.rel (0) target = $region25
    $region24: #{tpu_custom_call.1} parent=1 // pred_region
      %s586 = ssub.s32 16, 16
      %587 = vsyncadd [#allocation6], %s586
      %s589 = sshll.u32 [#allocation9], 4
      %s590 = int_to_ptr.vmem [resolvable:$true] %s589
      %592 = dma.vmem_to_hbm [thread:$0]  %s590, 16, %s2, [#allocation6]
    $region25: #{tpu_custom_call.1} parent=1 // pred_fallthru
      _
    // Predicated region
    $region26: #{tpu_custom_call.1} parent=1 // pred_check
      _
    $region27: #{tpu_custom_call.1} parent=1 // pred_check_branch
      %594 = sbr.rel (0) target = $region29
    $region28: #{tpu_custom_call.1} parent=1 // pred_region
      %595 = dma.done [#allocation6], 16
    $region29: #{tpu_custom_call.1} parent=1 // pred_fallthru
      _
    %596 = vsyncpa [#allocation5], 1
    %597 = vsyncpa [#allocation8], 1
    %598 = vsyncpa [#allocation6], 1

</llo_original>
